<compile_context>
chip_gen: v5e
topology: v5e:2x2
jax: 0.10.0
libtpu: 0.0.40
codegen_flags: <defaults>
</compile_context>

<pallas_src>
import functools

import jax
import jax.numpy as jnp
from jax.experimental import pallas as pl
from jax.experimental.pallas import tpu as pltpu


_LANE = 128                        # row-tile alignment (covers 8/16/32 sublane tiles)
_BLOCK_BUDGET_BYTES = 36 * 2**20   # VMEM budget used to size block_rows (~5-8 MiB/input block)
_VMEM_LIMIT_CEILING = 48 * 2**20   # leave headroom below v7x's 64 MiB physical VMEM
_MAX_BLOCK_ROWS = 32768            # bounds 1-D per-row temporaries / grid granularity
_MIN_SPLIT_STEP_BYTES = 2 * 2**20  # only force >=8 grid steps if steps stay >= 2 MiB


def _soft_ce_row_kernel(x_ref, t_ref, out_ref):
    """out[0, r] = sum_c target[r, c] * (logsumexp(x[r, :]) - x[r, c])."""
    x = x_ref[...].astype(jnp.float32)
    t = t_ref[...].astype(jnp.float32)

    # Numerically stable logsumexp along the class (lane) axis.
    m = jnp.max(x, axis=-1, keepdims=True)
    lse = jnp.log(jnp.sum(jnp.exp(x - m), axis=-1, keepdims=True)) + m

    # Reference form: -log_softmax(x) = lse - x; weight by target and reduce.
    loss = jnp.sum(t * (lse - x), axis=-1)          # (block_rows,)

    # Lane-dense store: rows live on the lane axis of the (1, block_rows) block.
    out_ref[...] = loss.reshape((1, -1))
    # TODO(synk): if a bundle profile shows the XLU reduce slot binding before
    # the DMA (possible for small/medium C), offload the two sums to the idle
    # MXU as (block_rows, C) @ ones((C, 1), f32) matvecs and keep only the max
    # on the XLU.


def _round_up(x, m):
    return (x + m - 1) // m * m


def _cdiv(a, b):
    return (a + b - 1) // b


def _choose_block_rows(N, C, in_dtype, t_dtype):
    in_item = jnp.dtype(in_dtype).itemsize
    t_item = jnp.dtype(t_dtype).itemsize
    # Per-row VMEM cost: 2 pipeline buffers per input stream + ~3 block-sized
    # f32 temporaries inside the kernel (upcast copies / exp) + lane-dense
    # output buffers and small 1-D temporaries.
    per_row = 2 * C * (in_item + t_item) + 3 * C * 4 + 64
    cand = max(_LANE, (_BLOCK_BUDGET_BYTES // per_row) // _LANE * _LANE)
    cand = min(cand, _MAX_BLOCK_ROWS)
    # Keep >= ~8 grid steps for large N (v7x megacore sharding + warm pipeline),
    # but never shrink a step below ~2 MiB of streamed input.
    split_rows = _round_up(_cdiv(N, 8), _LANE)
    if split_rows * C * (in_item + t_item) >= _MIN_SPLIT_STEP_BYTES:
        cand = min(cand, split_rows)
    return max(_LANE, min(cand, _round_up(N, _LANE)))


@functools.partial(jax.jit, static_argnames=("reduction", "block_rows"))
def soft_cross_entropy(inputs, target, reduction="sum", block_rows=None):
    """Pallas implementation of softCrossEntropy.forward.

    inputs: (N, C) predictions (logits)
    target: (N, C) soft target distribution
    """
    if reduction not in ("sum", "mean", "none"):
        raise ValueError(f"{reduction} is not a valid reduction")

    N, C = inputs.shape
    assert target.shape == (N, C)

    if block_rows is None:
        block_rows = _choose_block_rows(N, C, inputs.dtype, target.dtype)
    block_rows = max(_LANE, _round_up(block_rows, _LANE))
    n_blocks = _cdiv(N, block_rows)
    # No jnp.pad for ragged N: the trailing partial block reads past row N
    # (row-local garbage only) and the wrapper slices [:N] below, so masking
    # the target in-kernel is unnecessary for correctness.

    in_item = jnp.dtype(inputs.dtype).itemsize
    t_item = jnp.dtype(target.dtype).itemsize
    needed = (2 * block_rows * C * (in_item + t_item)   # double-buffered inputs
              + 3 * block_rows * C * 4                  # in-kernel f32 temporaries
              + 2 * block_rows * 4                      # lane-dense output buffers
              + block_rows * 64)                        # misc 1-D temporaries
    vmem_limit = int(min(_VMEM_LIMIT_CEILING, max(32 * 2**20, needed + 8 * 2**20)))

    per_row = pl.pallas_call(
        _soft_ce_row_kernel,
        out_shape=jax.ShapeDtypeStruct((1, n_blocks * block_rows), jnp.float32),
        grid_spec=pltpu.PrefetchScalarGridSpec(
            num_scalar_prefetch=0,
            grid=(n_blocks,),
            in_specs=[
                pl.BlockSpec((block_rows, C), lambda i: (i, 0)),
                pl.BlockSpec((block_rows, C), lambda i: (i, 0)),
            ],
            out_specs=pl.BlockSpec((1, block_rows), lambda i: (0, i)),
        ),
        compiler_params=pltpu.CompilerParams(
            dimension_semantics=("parallel",),   # row tiles are fully independent
            vmem_limit_bytes=vmem_limit,
        ),
    )(inputs, target)
    # TODO(synk): for C < 128 (e.g. class_num=32) pack k=128//C samples per lane
    # row (wrapper view (N, C) -> (N//k, k*C)) and do segmented lane sums on the
    # MXU against a block-diagonal ones matrix to recover 128/C x lane / VPU /
    # EUP utilization; not implemented here.
    # TODO(synk): vocab-scale C (>= 64K) needs a class-axis grid with an online
    # logsumexp so row tiles stay large; not needed for moderate C.

    per_sample = per_row[0, :N]
    if reduction == "none":
        return per_sample
    loss = jnp.sum(per_sample)              # tiny XLA glue over N scalars
    if reduction == "mean":
        loss = loss / jnp.float32(N)        # divide by sample_num
    return loss


def _reference(inputs, target, reduction):
    log_likelihood = -jax.nn.log_softmax(inputs.astype(jnp.float32), axis=1)
    per_sample = jnp.sum(log_likelihood * target.astype(jnp.float32), axis=1)
    if reduction == "sum":
        return jnp.sum(per_sample)
    if reduction == "mean":
        return jnp.sum(per_sample) / inputs.shape[0]
    return per_sample


if __name__ == "__main__":
    # Small shapes consistent with the module: sample_num=16, class_num=32.
    N, C = 16, 32
    key = jax.random.PRNGKey(0)
    k_in, k_tgt = jax.random.split(key)

    inputs = jax.random.normal(k_in, (N, C), dtype=jnp.float32)
    # Soft target labels: rows are probability distributions over classes.
    target = jax.nn.softmax(
        jax.random.normal(k_tgt, (N, C), dtype=jnp.float32) * 2.0, axis=1
    )

    ok = True
    for reduction in ("sum", "mean", "none"):
        got = jax.block_until_ready(soft_cross_entropy(inputs, target, reduction=reduction))
        want = _reference(inputs, target, reduction)
        if not jnp.allclose(got, want, rtol=1e-5, atol=1e-5):
            ok = False
            print(f"MISMATCH for reduction={reduction}: {got} vs {want}")

    # Ragged row count (exercises the partial trailing block / [:N] slice) with
    # bf16 inputs (halved HBM traffic, f32 accumulation in-kernel).
    N2, C2 = 50, 32
    k1, k2 = jax.random.split(jax.random.PRNGKey(0))
    x2 = jax.random.normal(k1, (N2, C2), dtype=jnp.float32).astype(jnp.bfloat16)
    t2 = jax.nn.softmax(
        jax.random.normal(k2, (N2, C2), dtype=jnp.float32), axis=1
    ).astype(jnp.bfloat16)
    got2 = jax.block_until_ready(soft_cross_entropy(x2, t2, reduction="mean"))
    want2 = _reference(x2, t2, "mean")
    if not jnp.allclose(got2, want2, rtol=1e-4, atol=1e-4):
        ok = False
        print(f"MISMATCH for bf16 mean: {got2} vs {want2}")

    if ok:
        print("KERNEL_OK")
</pallas_src>

<mosaic_0001>
module attributes {stable_mosaic.version = 11 : i64} {
  func.func @_soft_ce_row_kernel(%arg0: i32, %arg1: memref<128x32xf32, #tpu.memory_space<vmem>>, %arg2: memref<128x32xf32, #tpu.memory_space<vmem>>, %arg3: memref<1x128xf32, #tpu.memory_space<vmem>>) attributes {dimension_semantics = [#tpu.dimension_semantics<parallel>], iteration_bounds = array<i64: 1>, scalar_prefetch = 0 : i64, scratch_operands = 0 : i64, tpu.core_type = #tpu.core_type<tc>, window_params = [{transform_indices = @transform_0, window_bounds = array<i64: 128, 32>}, {transform_indices = @transform_1, window_bounds = array<i64: 128, 32>}, {transform_indices = @transform_2, window_bounds = array<i64: 1, 128>}]} {
    %c0 = arith.constant 0 : index
    %c0_0 = arith.constant 0 : index
    %0 = vector.load %arg1[%c0, %c0_0] : memref<128x32xf32, #tpu.memory_space<vmem>>, vector<128x32xf32>
    %c0_1 = arith.constant 0 : index
    %c0_2 = arith.constant 0 : index
    %1 = vector.load %arg2[%c0_1, %c0_2] : memref<128x32xf32, #tpu.memory_space<vmem>>, vector<128x32xf32>
    %cst = arith.constant dense<0xFF800000> : vector<128xf32>
    %2 = vector.multi_reduction <maximumf>, %0, %cst [1] : vector<128x32xf32> to vector<128xf32>
    %3 = vector.shape_cast %2 : vector<128xf32> to vector<128x1xf32>
    %4 = vector.broadcast %3 : vector<128x1xf32> to vector<128x32xf32>
    %5 = arith.subf %0, %4 : vector<128x32xf32>
    %6 = math.exp %5 : vector<128x32xf32>
    %cst_3 = arith.constant dense<0.000000e+00> : vector<128xf32>
    %7 = vector.multi_reduction <add>, %6, %cst_3 [1] : vector<128x32xf32> to vector<128xf32>
    %8 = vector.shape_cast %7 : vector<128xf32> to vector<128x1xf32>
    %9 = math.log %8 : vector<128x1xf32>
    %10 = arith.addf %9, %3 : vector<128x1xf32>
    %11 = vector.broadcast %10 : vector<128x1xf32> to vector<128x32xf32>
    %12 = arith.subf %11, %0 : vector<128x32xf32>
    %13 = arith.mulf %1, %12 : vector<128x32xf32>
    %cst_4 = arith.constant dense<0.000000e+00> : vector<128xf32>
    %14 = vector.multi_reduction <add>, %13, %cst_4 [1] : vector<128x32xf32> to vector<128xf32>
    %15 = vector.shape_cast %14 : vector<128xf32> to vector<1x128xf32>
    %c0_5 = arith.constant 0 : index
    %c0_6 = arith.constant 0 : index
    %16 = vector.load %arg3[%c0_5, %c0_6] : memref<1x128xf32, #tpu.memory_space<vmem>>, vector<1x128xf32>
    tpu.vector_store %arg3[%c0_5, %c0_6], %15 {strides = array<i32>} : memref<1x128xf32, #tpu.memory_space<vmem>>, vector<1x128xf32>,
    return
  }
  func.func @transform_0(%arg0: i32) -> (i32, i32) {
    %c0_i32 = arith.constant 0 : i32
    %c0_i32_0 = arith.constant 0 : i32
    return %arg0, %c0_i32 : i32, i32
  }
  func.func @transform_1(%arg0: i32) -> (i32, i32) {
    %c0_i32 = arith.constant 0 : i32
    %c0_i32_0 = arith.constant 0 : i32
    return %arg0, %c0_i32 : i32, i32
  }
  func.func @transform_2(%arg0: i32) -> (i32, i32) {
    %c0_i32 = arith.constant 0 : i32
    %c0_i32_0 = arith.constant 0 : i32
    return %c0_i32, %arg0 : i32, i32
  }
}

</mosaic_0001>

<llo_original>
// kernel: soft_cross_entropy.1
$region0: #{soft_cross_entropy.1}
  #allocation0 [shape = 'u32[]', space=smem, size = 0x4, offset = 0x4, fixed_abs, tag = 'smem constant byte address 0x4 - core index']
  #allocation1 [shape = 'u32[72,128]{1,0:T(1,128)}', space=vmem, size = 0x9000, scoped, tag = 'internal scratch']
  %s0 = inlined_call_operand.hbm [shape: f32[16,32], index: 0, kind: input, shape index: {}]
  %s1 = inlined_call_operand.hbm [shape: f32[16,32], index: 1, kind: input, shape index: {}]
  %s2 = inlined_call_operand.vmem [shape: f32[1,128], index: 2, kind: output, shape index: {}]
  %s3 = sld [smem:[#allocation0]]
  $region26: #{soft_cross_entropy.1} parent=0
    _
  %s5 = ssub.s32 1, %s3
  %s6 = scalar_select 0, %s5, %s3
  $region1: #{soft_cross_entropy.1} parent=0
    #allocation2 [shape = 'u8[65536]{0}', space=vmem, size = 0x10000, scoped, tag = 'input window, operand 0, single buffered']
    #allocation3 [shape = 's32[1]{0}', space=sflag, size = 0x4, scoped, tag = 'scoped memory for soft_cross_entropy.1']
    #allocation4 [shape = 'u8[65536]{0}', space=vmem, size = 0x10000, scoped, tag = 'input window, operand 1, single buffered']
    #allocation5 [shape = 's32[1]{0}', space=sflag, size = 0x4, scoped, tag = 'scoped memory for soft_cross_entropy.1']
    %7 = vsyncpa [#allocation3], 0
    %8 = vsyncpa [#allocation5], 0
    // Predicated region
    $region2: #{soft_cross_entropy.1} parent=1 // pred_check
      _
    $region3: #{soft_cross_entropy.1} parent=1 // pred_check_branch
      %10 = sbr.rel (0) target = $region5
    $region4: #{soft_cross_entropy.1} parent=1 // pred_region
      %12 = vsyncadd [#allocation3], 1792
      %s13 = sshll.u32 %s0, 4
      %s14 = int_to_ptr.hbm [resolvable:$true] %s13
      %s15 = sshll.u32 [#allocation2], 4
      %s16 = int_to_ptr.vmem [resolvable:$true] %s15
      %21 = dma.hbm_to_vmem [thread:$0]  %s14, 256, %s16, [#allocation3], 128, 128, 8
    $region5: #{soft_cross_entropy.1} parent=1 // pred_fallthru
      _
    // Predicated region
    $region6: #{soft_cross_entropy.1} parent=1 // pred_check
      _
    $region7: #{soft_cross_entropy.1} parent=1 // pred_check_branch
      %23 = sbr.rel (0) target = $region9
    $region8: #{soft_cross_entropy.1} parent=1 // pred_region
      %25 = vsyncadd [#allocation5], 1792
      %s26 = sshll.u32 %s1, 4
      %s27 = int_to_ptr.hbm [resolvable:$true] %s26
      %s28 = sshll.u32 [#allocation4], 4
      %s29 = int_to_ptr.vmem [resolvable:$true] %s28
      %34 = dma.hbm_to_vmem [thread:$0]  %s27, 256, %s29, [#allocation5], 128, 128, 8
    $region9: #{soft_cross_entropy.1} parent=1 // pred_fallthru
      _
    // Predicated region
    $region10: #{soft_cross_entropy.1} parent=1 // pred_check
      _
    $region11: #{soft_cross_entropy.1} parent=1 // pred_check_branch
      %36 = sbr.rel (0) target = $region13
    $region12: #{soft_cross_entropy.1} parent=1 // pred_region
      %38 = dma.done [#allocation3], 2048
    $region13: #{soft_cross_entropy.1} parent=1 // pred_fallthru
      _
    // Predicated region
    $region14: #{soft_cross_entropy.1} parent=1 // pred_check
      _
    $region15: #{soft_cross_entropy.1} parent=1 // pred_check_branch
      %40 = sbr.rel (0) target = $region17
    $region16: #{soft_cross_entropy.1} parent=1 // pred_region
      %42 = dma.done [#allocation5], 2048
    $region17: #{soft_cross_entropy.1} parent=1 // pred_fallthru
      _
    %v43 = vld [vmem:[#allocation2] sm:$0xff]
    %v44 = vld [vmem:[#allocation2 + $0x8] sm:$0xff]
    %v45 = vld [vmem:[#allocation2 + $0x10] sm:$0xff]
    %v46 = vld [vmem:[#allocation2 + $0x18] sm:$0xff]
    %v47 = vld [vmem:[#allocation2 + $0x20] sm:$0xff]
    %v48 = vld [vmem:[#allocation2 + $0x28] sm:$0xff]
    %v49 = vld [vmem:[#allocation2 + $0x30] sm:$0xff]
    %v50 = vld [vmem:[#allocation2 + $0x38] sm:$0xff]
    %v51 = vld [vmem:[#allocation2 + $0x40] sm:$0xff]
    %v52 = vld [vmem:[#allocation2 + $0x48] sm:$0xff]
    %v53 = vld [vmem:[#allocation2 + $0x50] sm:$0xff]
    %v54 = vld [vmem:[#allocation2 + $0x58] sm:$0xff]
    %v55 = vld [vmem:[#allocation2 + $0x60] sm:$0xff]
    %v56 = vld [vmem:[#allocation2 + $0x68] sm:$0xff]
    %v57 = vld [vmem:[#allocation2 + $0x70] sm:$0xff]
    %v58 = vld [vmem:[#allocation2 + $0x78] sm:$0xff]
    %v59 = vld [vmem:[#allocation4] sm:$0xff]
    %v60 = vld [vmem:[#allocation4 + $0x8] sm:$0xff]
    %v61 = vld [vmem:[#allocation4 + $0x10] sm:$0xff]
    %v62 = vld [vmem:[#allocation4 + $0x18] sm:$0xff]
    %v63 = vld [vmem:[#allocation4 + $0x20] sm:$0xff]
    %v64 = vld [vmem:[#allocation4 + $0x28] sm:$0xff]
    %v65 = vld [vmem:[#allocation4 + $0x30] sm:$0xff]
    %v66 = vld [vmem:[#allocation4 + $0x38] sm:$0xff]
    %v67 = vld [vmem:[#allocation4 + $0x40] sm:$0xff]
    %v68 = vld [vmem:[#allocation4 + $0x48] sm:$0xff]
    %v69 = vld [vmem:[#allocation4 + $0x50] sm:$0xff]
    %v70 = vld [vmem:[#allocation4 + $0x58] sm:$0xff]
    %v71 = vld [vmem:[#allocation4 + $0x60] sm:$0xff]
    %v72 = vld [vmem:[#allocation4 + $0x68] sm:$0xff]
    %v73 = vld [vmem:[#allocation4 + $0x70] sm:$0xff]
    %v74 = vld [vmem:[#allocation4 + $0x78] sm:$0xff]
    %vm75 = vcmask 261120
    %v76 = vsel %vm75, %v43, -inf
    %77 = vmax.xlane.f32.xlu0 %v76
    %v78 = vpop.xlane.xlu0 %77
    %v79 = vsel %vm75, %v44, -inf
    %80 = vmax.xlane.f32.xlu0 %v79
    %v81 = vpop.xlane.xlu0 %80
    %v82 = vsel %vm75, %v45, -inf
    %83 = vmax.xlane.f32.xlu0 %v82
    %v84 = vpop.xlane.xlu0 %83
    %v85 = vsel %vm75, %v46, -inf
    %86 = vmax.xlane.f32.xlu0 %v85
    %v87 = vpop.xlane.xlu0 %86
    %v88 = vsel %vm75, %v47, -inf
    %89 = vmax.xlane.f32.xlu0 %v88
    %v90 = vpop.xlane.xlu0 %89
    %v91 = vsel %vm75, %v48, -inf
    %92 = vmax.xlane.f32.xlu0 %v91
    %v93 = vpop.xlane.xlu0 %92
    %v94 = vsel %vm75, %v49, -inf
    %95 = vmax.xlane.f32.xlu0 %v94
    %v96 = vpop.xlane.xlu0 %95
    %v97 = vsel %vm75, %v50, -inf
    %98 = vmax.xlane.f32.xlu0 %v97
    %v99 = vpop.xlane.xlu0 %98
    %v100 = vsel %vm75, %v51, -inf
    %101 = vmax.xlane.f32.xlu0 %v100
    %v102 = vpop.xlane.xlu0 %101
    %v103 = vsel %vm75, %v52, -inf
    %104 = vmax.xlane.f32.xlu0 %v103
    %v105 = vpop.xlane.xlu0 %104
    %v106 = vsel %vm75, %v53, -inf
    %107 = vmax.xlane.f32.xlu0 %v106
    %v108 = vpop.xlane.xlu0 %107
    %v109 = vsel %vm75, %v54, -inf
    %110 = vmax.xlane.f32.xlu0 %v109
    %v111 = vpop.xlane.xlu0 %110
    %v112 = vsel %vm75, %v55, -inf
    %113 = vmax.xlane.f32.xlu0 %v112
    %v114 = vpop.xlane.xlu0 %113
    %v115 = vsel %vm75, %v56, -inf
    %116 = vmax.xlane.f32.xlu0 %v115
    %v117 = vpop.xlane.xlu0 %116
    %v118 = vsel %vm75, %v57, -inf
    %119 = vmax.xlane.f32.xlu0 %v118
    %v120 = vpop.xlane.xlu0 %119
    %v121 = vsel %vm75, %v58, -inf
    %122 = vmax.xlane.f32.xlu0 %v121
    %v123 = vpop.xlane.xlu0 %122
    %v124 = vsub.f32 %v43, %v78
    %v125 = vsub.f32 %v44, %v81
    %v126 = vsub.f32 %v45, %v84
    %v127 = vsub.f32 %v46, %v87
    %v128 = vsub.f32 %v47, %v90
    %v129 = vsub.f32 %v48, %v93
    %v130 = vsub.f32 %v49, %v96
    %v131 = vsub.f32 %v50, %v99
    %v132 = vsub.f32 %v51, %v102
    %v133 = vsub.f32 %v52, %v105
    %v134 = vsub.f32 %v53, %v108
    %v135 = vsub.f32 %v54, %v111
    %v136 = vsub.f32 %v55, %v114
    %v137 = vsub.f32 %v56, %v117
    %v138 = vsub.f32 %v57, %v120
    %v139 = vsub.f32 %v58, %v123
    %v140 = vmul.f32 %v124, 1.442695
    %v141 = vpow.pop %v140
    %v142 = vmul.f32 %v125, 1.442695
    %v143 = vpow.pop %v142
    %v144 = vmul.f32 %v126, 1.442695
    %v145 = vpow.pop %v144
    %v146 = vmul.f32 %v127, 1.442695
    %v147 = vpow.pop %v146
    %v148 = vmul.f32 %v128, 1.442695
    %v149 = vpow.pop %v148
    %v150 = vmul.f32 %v129, 1.442695
    %v151 = vpow.pop %v150
    %v152 = vmul.f32 %v130, 1.442695
    %v153 = vpow.pop %v152
    %v154 = vmul.f32 %v131, 1.442695
    %v155 = vpow.pop %v154
    %v156 = vmul.f32 %v132, 1.442695
    %v157 = vpow.pop %v156
    %v158 = vmul.f32 %v133, 1.442695
    %v159 = vpow.pop %v158
    %v160 = vmul.f32 %v134, 1.442695
    %v161 = vpow.pop %v160
    %v162 = vmul.f32 %v135, 1.442695
    %v163 = vpow.pop %v162
    %v164 = vmul.f32 %v136, 1.442695
    %v165 = vpow.pop %v164
    %v166 = vmul.f32 %v137, 1.442695
    %v167 = vpow.pop %v166
    %v168 = vmul.f32 %v138, 1.442695
    %v169 = vpow.pop %v168
    %v170 = vmul.f32 %v139, 1.442695
    %v171 = vpow.pop %v170
    %v172 = vsel %vm75, %v141, 0.0
    %173 = vadd.xlane.f32.xlu0 %v172
    %v174 = vpop.xlane.xlu0 %173
    %v175 = vsel %vm75, %v143, 0.0
    %176 = vadd.xlane.f32.xlu0 %v175
    %v177 = vpop.xlane.xlu0 %176
    %v178 = vsel %vm75, %v145, 0.0
    %179 = vadd.xlane.f32.xlu0 %v178
    %v180 = vpop.xlane.xlu0 %179
    %v181 = vsel %vm75, %v147, 0.0
    %182 = vadd.xlane.f32.xlu0 %v181
    %v183 = vpop.xlane.xlu0 %182
    %v184 = vsel %vm75, %v149, 0.0
    %185 = vadd.xlane.f32.xlu0 %v184
    %v186 = vpop.xlane.xlu0 %185
    %v187 = vsel %vm75, %v151, 0.0
    %188 = vadd.xlane.f32.xlu0 %v187
    %v189 = vpop.xlane.xlu0 %188
    %v190 = vsel %vm75, %v153, 0.0
    %191 = vadd.xlane.f32.xlu0 %v190
    %v192 = vpop.xlane.xlu0 %191
    %v193 = vsel %vm75, %v155, 0.0
    %194 = vadd.xlane.f32.xlu0 %v193
    %v195 = vpop.xlane.xlu0 %194
    %v196 = vsel %vm75, %v157, 0.0
    %197 = vadd.xlane.f32.xlu0 %v196
    %v198 = vpop.xlane.xlu0 %197
    %v199 = vsel %vm75, %v159, 0.0
    %200 = vadd.xlane.f32.xlu0 %v199
    %v201 = vpop.xlane.xlu0 %200
    %v202 = vsel %vm75, %v161, 0.0
    %203 = vadd.xlane.f32.xlu0 %v202
    %v204 = vpop.xlane.xlu0 %203
    %v205 = vsel %vm75, %v163, 0.0
    %206 = vadd.xlane.f32.xlu0 %v205
    %v207 = vpop.xlane.xlu0 %206
    %v208 = vsel %vm75, %v165, 0.0
    %209 = vadd.xlane.f32.xlu0 %v208
    %v210 = vpop.xlane.xlu0 %209
    %v211 = vsel %vm75, %v167, 0.0
    %212 = vadd.xlane.f32.xlu0 %v211
    %v213 = vpop.xlane.xlu0 %212
    %v214 = vsel %vm75, %v169, 0.0
    %215 = vadd.xlane.f32.xlu0 %v214
    %v216 = vpop.xlane.xlu0 %215
    %v217 = vsel %vm75, %v171, 0.0
    %218 = vadd.xlane.f32.xlu0 %v217
    %v219 = vpop.xlane.xlu0 %218
    %v220 = vlog2.pop %v174
    %v221 = vmul.f32 %v220, 0.6931472
    %v222 = vlog2.pop %v177
    %v223 = vmul.f32 %v222, 0.6931472
    %v224 = vlog2.pop %v180
    %v225 = vmul.f32 %v224, 0.6931472
    %v226 = vlog2.pop %v183
    %v227 = vmul.f32 %v226, 0.6931472
    %v228 = vlog2.pop %v186
    %v229 = vmul.f32 %v228, 0.6931472
    %v230 = vlog2.pop %v189
    %v231 = vmul.f32 %v230, 0.6931472
    %v232 = vlog2.pop %v192
    %v233 = vmul.f32 %v232, 0.6931472
    %v234 = vlog2.pop %v195
    %v235 = vmul.f32 %v234, 0.6931472
    %v236 = vlog2.pop %v198
    %v237 = vmul.f32 %v236, 0.6931472
    %v238 = vlog2.pop %v201
    %v239 = vmul.f32 %v238, 0.6931472
    %v240 = vlog2.pop %v204
    %v241 = vmul.f32 %v240, 0.6931472
    %v242 = vlog2.pop %v207
    %v243 = vmul.f32 %v242, 0.6931472
    %v244 = vlog2.pop %v210
    %v245 = vmul.f32 %v244, 0.6931472
    %v246 = vlog2.pop %v213
    %v247 = vmul.f32 %v246, 0.6931472
    %v248 = vlog2.pop %v216
    %v249 = vmul.f32 %v248, 0.6931472
    %v250 = vlog2.pop %v219
    %v251 = vmul.f32 %v250, 0.6931472
    %v252 = vadd.f32 %v221, %v78
    %v253 = vadd.f32 %v223, %v81
    %v254 = vadd.f32 %v225, %v84
    %v255 = vadd.f32 %v227, %v87
    %v256 = vadd.f32 %v229, %v90
    %v257 = vadd.f32 %v231, %v93
    %v258 = vadd.f32 %v233, %v96
    %v259 = vadd.f32 %v235, %v99
    %v260 = vadd.f32 %v237, %v102
    %v261 = vadd.f32 %v239, %v105
    %v262 = vadd.f32 %v241, %v108
    %v263 = vadd.f32 %v243, %v111
    %v264 = vadd.f32 %v245, %v114
    %v265 = vadd.f32 %v247, %v117
    %v266 = vadd.f32 %v249, %v120
    %v267 = vadd.f32 %v251, %v123
    %v268 = vsub.f32 %v252, %v43
    %v269 = vsub.f32 %v253, %v44
    %v270 = vsub.f32 %v254, %v45
    %v271 = vsub.f32 %v255, %v46
    %v272 = vsub.f32 %v256, %v47
    %v273 = vsub.f32 %v257, %v48
    %v274 = vsub.f32 %v258, %v49
    %v275 = vsub.f32 %v259, %v50
    %v276 = vsub.f32 %v260, %v51
    %v277 = vsub.f32 %v261, %v52
    %v278 = vsub.f32 %v262, %v53
    %v279 = vsub.f32 %v263, %v54
    %v280 = vsub.f32 %v264, %v55
    %v281 = vsub.f32 %v265, %v56
    %v282 = vsub.f32 %v266, %v57
    %v283 = vsub.f32 %v267, %v58
    %v284 = vmul.f32 %v59, %v268
    %v285 = vmul.f32 %v60, %v269
    %v286 = vmul.f32 %v61, %v270
    %v287 = vmul.f32 %v62, %v271
    %v288 = vmul.f32 %v63, %v272
    %v289 = vmul.f32 %v64, %v273
    %v290 = vmul.f32 %v65, %v274
    %v291 = vmul.f32 %v66, %v275
    %v292 = vmul.f32 %v67, %v276
    %v293 = vmul.f32 %v68, %v277
    %v294 = vmul.f32 %v69, %v278
    %v295 = vmul.f32 %v70, %v279
    %v296 = vmul.f32 %v71, %v280
    %v297 = vmul.f32 %v72, %v281
    %v298 = vmul.f32 %v73, %v282
    %v299 = vmul.f32 %v74, %v283
    %v300 = vsel %vm75, %v284, 0.0
    %301 = vadd.xlane.f32.xlu0 %v300
    %v302 = vpop.xlane.xlu0 %301
    %v303 = vsel %vm75, %v285, 0.0
    %304 = vadd.xlane.f32.xlu0 %v303
    %v305 = vpop.xlane.xlu0 %304
    %v306 = vsel %vm75, %v286, 0.0
    %307 = vadd.xlane.f32.xlu0 %v306
    %v308 = vpop.xlane.xlu0 %307
    %v309 = vsel %vm75, %v287, 0.0
    %310 = vadd.xlane.f32.xlu0 %v309
    %v311 = vpop.xlane.xlu0 %310
    %v312 = vsel %vm75, %v288, 0.0
    %313 = vadd.xlane.f32.xlu0 %v312
    %v314 = vpop.xlane.xlu0 %313
    %v315 = vsel %vm75, %v289, 0.0
    %316 = vadd.xlane.f32.xlu0 %v315
    %v317 = vpop.xlane.xlu0 %316
    %v318 = vsel %vm75, %v290, 0.0
    %319 = vadd.xlane.f32.xlu0 %v318
    %v320 = vpop.xlane.xlu0 %319
    %v321 = vsel %vm75, %v291, 0.0
    %322 = vadd.xlane.f32.xlu0 %v321
    %v323 = vpop.xlane.xlu0 %322
    %v324 = vsel %vm75, %v292, 0.0
    %325 = vadd.xlane.f32.xlu0 %v324
    %v326 = vpop.xlane.xlu0 %325
    %v327 = vsel %vm75, %v293, 0.0
    %328 = vadd.xlane.f32.xlu0 %v327
    %v329 = vpop.xlane.xlu0 %328
    %v330 = vsel %vm75, %v294, 0.0
    %331 = vadd.xlane.f32.xlu0 %v330
    %v332 = vpop.xlane.xlu0 %331
    %v333 = vsel %vm75, %v295, 0.0
    %334 = vadd.xlane.f32.xlu0 %v333
    %v335 = vpop.xlane.xlu0 %334
    %v336 = vsel %vm75, %v296, 0.0
    %337 = vadd.xlane.f32.xlu0 %v336
    %v338 = vpop.xlane.xlu0 %337
    %v339 = vsel %vm75, %v297, 0.0
    %340 = vadd.xlane.f32.xlu0 %v339
    %v341 = vpop.xlane.xlu0 %340
    %v342 = vsel %vm75, %v298, 0.0
    %343 = vadd.xlane.f32.xlu0 %v342
    %v344 = vpop.xlane.xlu0 %343
    %v345 = vsel %vm75, %v299, 0.0
    %346 = vadd.xlane.f32.xlu0 %v345
    %v347 = vpop.xlane.xlu0 %346
    %v364 = vlaneseq
    %v365 = vand.u32 %v364, 127
    %v366 = vperm.slane %v302, %v365
    %v367 = vadd.s32 %v365, 4294967288
    %v368 = vperm.slane %v305, %v367
    %vm369 = vcmask 130112
    %v370 = vsel %vm369, %v368, %v366
    %v371 = vadd.s32 %v365, 4294967280
    %v372 = vperm.slane %v308, %v371
    %vm373 = vcmask 195712
    %v374 = vsel %vm373, %v372, %v370
    %v375 = vadd.s32 %v365, 4294967272
    %v376 = vperm.slane %v311, %v375
    %vm377 = vcmask 261312
    %v378 = vsel %vm377, %v376, %v374
    %v379 = vadd.s32 %v365, 4294967264
    %v380 = vperm.slane %v314, %v379
    %vm381 = vcmask 326912
    %v382 = vsel %vm381, %v380, %v378
    %v383 = vadd.s32 %v365, 4294967256
    %v384 = vperm.slane %v317, %v383
    %vm385 = vcmask 392512
    %v386 = vsel %vm385, %v384, %v382
    %v387 = vadd.s32 %v365, 4294967248
    %v388 = vperm.slane %v320, %v387
    %vm389 = vcmask 458112
    %v390 = vsel %vm389, %v388, %v386
    %v391 = vadd.s32 %v365, 4294967240
    %v392 = vperm.slane %v323, %v391
    %vm393 = vcmask 523712
    %v394 = vsel %vm393, %v392, %v390
    %v395 = vadd.s32 %v365, 4294967232
    %v396 = vperm.slane %v326, %v395
    %vm397 = vcmask 589312
    %v398 = vsel %vm397, %v396, %v394
    %v399 = vadd.s32 %v365, 4294967224
    %v400 = vperm.slane %v329, %v399
    %vm401 = vcmask 654912
    %v402 = vsel %vm401, %v400, %v398
    %v403 = vadd.s32 %v365, 4294967216
    %v404 = vperm.slane %v332, %v403
    %vm405 = vcmask 720512
    %v406 = vsel %vm405, %v404, %v402
    %v407 = vadd.s32 %v365, 4294967208
    %v408 = vperm.slane %v335, %v407
    %vm409 = vcmask 786112
    %v410 = vsel %vm409, %v408, %v406
    %v411 = vadd.s32 %v365, 4294967200
    %v412 = vperm.slane %v338, %v411
    %vm413 = vcmask 851712
    %v414 = vsel %vm413, %v412, %v410
    %v415 = vadd.s32 %v365, 4294967192
    %v416 = vperm.slane %v341, %v415
    %vm417 = vcmask 917312
    %v418 = vsel %vm417, %v416, %v414
    %v419 = vadd.s32 %v365, 4294967184
    %v420 = vperm.slane %v344, %v419
    %vm421 = vcmask 982912
    %v422 = vsel %vm421, %v420, %v418
    %v423 = vadd.s32 %v365, 4294967176
    %v424 = vperm.slane %v347, %v423
    %vm425 = vcmask 1048512
    %v426 = vsel %vm425, %v424, %v422
    %428 = vst [vmem:[%s2] sm:$0x1] %v426
    // Predicated region
    $region18: #{soft_cross_entropy.1} parent=1 // pred_check
      _
    $region19: #{soft_cross_entropy.1} parent=1 // pred_check_branch
      %430 = sbr.rel (0) target = $region21
    $region20: #{soft_cross_entropy.1} parent=1 // pred_region
      _
    $region21: #{soft_cross_entropy.1} parent=1 // pred_fallthru
      _
    // Predicated region
    $region22: #{soft_cross_entropy.1} parent=1 // pred_check
      _
    $region23: #{soft_cross_entropy.1} parent=1 // pred_check_branch
      %432 = sbr.rel (0) target = $region25
    $region24: #{soft_cross_entropy.1} parent=1 // pred_region
      _
    $region25: #{soft_cross_entropy.1} parent=1 // pred_fallthru
      _
    %433 = vsyncpa [#allocation3], 1
    %434 = vsyncpa [#allocation5], 1

</llo_original>
